<compile_context>
chip_gen: v7x
topology: tpu7x:2x2x1
jax: 0.10.0
libtpu: 0.0.40
codegen_flags: <defaults>
</compile_context>

<pallas_src>
import jax
import jax.numpy as jnp
from jax import lax
from jax.experimental import pallas as pl
from jax.experimental.pallas import tpu as pltpu


def _round_up(n, m):
    return ((n + m - 1) // m) * m


def mlp_kernel(x_ref, w1_ref, b1_ref, w2_ref, b2_ref, o_ref):
    # x:  [TB, 20]   w1: [H, 20]   b1: [H, 1]
    # w2: [H, 1]     b2: SMEM (1,) o:  [1, TB]   (batch on lanes)
    x = x_ref[...]

    # fc1 in transposed orientation on the MXU without materializing x.T:
    # contract the feature axis of both operands -> h[H, TB], f32 accumulate.
    h = lax.dot_general(
        w1_ref[...], x,
        dimension_numbers=(((1,), (1,)), ((), ())),
        preferred_element_type=jnp.float32)
    h = jnp.maximum(h + b1_ref[...], 0.0)            # bias broadcast over lanes

    # fc2 (output width 1) on VPU + XLU: multiply by the w2 column and reduce
    # over the H sublanes -> lane-dense [1, TB].
    z = jnp.sum(h * w2_ref[...], axis=0, keepdims=True) + b2_ref[0]

    o_ref[...] = jax.nn.sigmoid(z).astype(o_ref.dtype)


def net_forward(x, w1, b1, w2, b2, *, block_b=8192):
    """x: [B, 20] f32 -> [B, 1] f32.  Matches PyTorch Net.forward."""
    B, in_features = x.shape
    H = w1.shape[0]

    # Lane-aligned batch tile (multiple of 128), capped at block_b.
    TB = min(_round_up(block_b, 128), _round_up(B, 128))
    # Keep at least 2 grid steps when the batch allows it, so the "parallel"
    # axis can shard across both v7x TensorCores (harmless on v5e/v6e).
    if B >= 256:
        TB = min(TB, _round_up(-(-B // 2), 128))
    grid_steps = pl.cdiv(B, TB)

    # Advisory cost: ~420 FLOPs and ~84 bytes per row (H=10), 1 sigmoid/row.
    cost = pl.CostEstimate(
        flops=2 * B * in_features * H + 2 * B * H,
        transcendentals=B,
        bytes_accessed=B * (in_features + 1) * 4
        + (H * in_features + 2 * H + 1) * 4,
    )

    out = pl.pallas_call(
        mlp_kernel,
        out_shape=jax.ShapeDtypeStruct((1, B), jnp.float32),
        grid=(grid_steps,),
        in_specs=[
            pl.BlockSpec((TB, in_features), lambda i: (i, 0)),   # stream x rows
            pl.BlockSpec((H, in_features), lambda i: (0, 0)),    # W1 resident
            pl.BlockSpec((H, 1), lambda i: (0, 0)),              # b1 resident
            pl.BlockSpec((H, 1), lambda i: (0, 0)),              # w2 resident
            pl.BlockSpec(memory_space=pltpu.MemorySpace.SMEM),   # b2 scalar
        ],
        out_specs=pl.BlockSpec((1, TB), lambda i: (0, i)),       # lane-dense out
        compiler_params=pltpu.CompilerParams(
            dimension_semantics=("parallel",),
            vmem_limit_bytes=32 * 1024 * 1024),
        cost_estimate=cost,
    )(x, w1, b1, w2, b2)

    return out[0, :B].reshape(B, 1)


def init_params(key, in_features=20, num_neurons=10):
    """Deterministic init mimicking nn.Linear's uniform(-1/sqrt(fan_in), ...)."""
    k1, k2, k3, k4 = jax.random.split(key, 4)
    bound1 = 1.0 / jnp.sqrt(in_features)
    bound2 = 1.0 / jnp.sqrt(num_neurons)
    # w1 kept in PyTorch's [out, in] layout; w2 stored as a column [H, 1]
    # (transposed vs PyTorch's [1, H]) so it broadcasts over lanes in-kernel.
    w1 = jax.random.uniform(k1, (num_neurons, in_features), jnp.float32, -bound1, bound1)
    b1 = jax.random.uniform(k2, (num_neurons, 1), jnp.float32, -bound1, bound1)
    w2 = jax.random.uniform(k3, (num_neurons, 1), jnp.float32, -bound2, bound2)
    b2 = jax.random.uniform(k4, (1,), jnp.float32, -bound2, bound2)
    return w1, b1, w2, b2


def net_reference(x, w1, b1, w2, b2):
    """Plain-JAX reference with identical math."""
    h = jnp.maximum(x @ w1.T + b1[:, 0][None, :], 0.0)
    return jax.nn.sigmoid(h @ w2 + b2[0])


if __name__ == "__main__":
    key = jax.random.PRNGKey(0)
    k_x, k_x2, k_p = jax.random.split(key, 3)

    IN, H = 20, 10
    w1, b1, w2, b2 = init_params(k_p, IN, H)

    # Small batch (single partial 128-lane tile; masked store path).
    x = jax.random.normal(k_x, (8, IN), dtype=jnp.float32)
    y = net_forward(x, w1, b1, w2, b2)
    jax.block_until_ready(y)
    y_ref = net_reference(x, w1, b1, w2, b2)
    assert y.shape == (8, 1)
    assert jnp.allclose(y, y_ref, atol=1e-5, rtol=1e-5)

    # Ragged batch exercising the pad-free cdiv grid: 3 steps at block_b=128,
    # with a partial (masked) last block and a multi-step "parallel" axis.
    x2 = jax.random.normal(k_x2, (300, IN), dtype=jnp.float32)
    y2 = net_forward(x2, w1, b1, w2, b2, block_b=128)
    jax.block_until_ready(y2)
    y2_ref = net_reference(x2, w1, b1, w2, b2)
    assert y2.shape == (300, 1)
    assert jnp.allclose(y2, y2_ref, atol=1e-5, rtol=1e-5)

    # Default (large-tile) path on the same ragged batch: 2 grid steps.
    y3 = net_forward(x2, w1, b1, w2, b2)
    jax.block_until_ready(y3)
    assert jnp.allclose(y3, y2_ref, atol=1e-5, rtol=1e-5)

    print("KERNEL_OK")
</pallas_src>

<mosaic_0001>
module attributes {stable_mosaic.version = 11 : i64} {
  func.func @mlp_kernel(%arg0: i32, %arg1: memref<128x20xf32, #tpu.memory_space<vmem>>, %arg2: memref<10x20xf32, #tpu.memory_space<vmem>>, %arg3: memref<10x1xf32, #tpu.memory_space<vmem>>, %arg4: memref<10x1xf32, #tpu.memory_space<vmem>>, %arg5: memref<1xf32, #tpu.memory_space<smem>>, %arg6: memref<1x128xf32, #tpu.memory_space<vmem>>) attributes {dimension_semantics = [#tpu.dimension_semantics<parallel>], iteration_bounds = array<i64: 1>, scalar_prefetch = 0 : i64, scratch_operands = 0 : i64, tpu.core_type = #tpu.core_type<tc>, window_params = [{transform_indices = @transform_0, window_bounds = array<i64: 128, 20>}, {pipeline_mode = #tpu.pipeline_mode<synchronous>, transform_indices = @transform_1, window_bounds = array<i64: 10, 20>}, {pipeline_mode = #tpu.pipeline_mode<synchronous>, transform_indices = @transform_2, window_bounds = array<i64: 10, 1>}, {pipeline_mode = #tpu.pipeline_mode<synchronous>, transform_indices = @transform_3, window_bounds = array<i64: 10, 1>}, {transform_indices = @transform_4, window_bounds = array<i64: 1>}, {transform_indices = @transform_5, window_bounds = array<i64: 1, 128>}]} {
    %c0 = arith.constant 0 : index
    %c0_0 = arith.constant 0 : index
    %0 = vector.load %arg1[%c0, %c0_0] : memref<128x20xf32, #tpu.memory_space<vmem>>, vector<128x20xf32>
    %c0_1 = arith.constant 0 : index
    %c0_2 = arith.constant 0 : index
    %1 = vector.load %arg2[%c0_1, %c0_2] : memref<10x20xf32, #tpu.memory_space<vmem>>, vector<10x20xf32>
    %cst = arith.constant dense<0.000000e+00> : vector<10x128xf32>
    %2 = tpu.matmul %1, %0, %cst {dimension_numbers = #tpu.dot_dimension_numbers<[1], [1], [0], [0], [0, 0, 1, 0], [], []>} : vector<10x20xf32>, vector<128x20xf32>, vector<10x128xf32> -> vector<10x128xf32>
    %c0_3 = arith.constant 0 : index
    %c0_4 = arith.constant 0 : index
    %3 = vector.load %arg3[%c0_3, %c0_4] : memref<10x1xf32, #tpu.memory_space<vmem>>, vector<10x1xf32>
    %4 = vector.broadcast %3 : vector<10x1xf32> to vector<10x128xf32>
    %5 = arith.addf %2, %4 : vector<10x128xf32>
    %cst_5 = arith.constant 0.000000e+00 : f32
    %6 = vector.broadcast %cst_5 : f32 to vector<10x128xf32>
    %7 = arith.maximumf %5, %6 : vector<10x128xf32>
    %c0_6 = arith.constant 0 : index
    %c0_7 = arith.constant 0 : index
    %8 = vector.load %arg4[%c0_6, %c0_7] : memref<10x1xf32, #tpu.memory_space<vmem>>, vector<10x1xf32>
    %9 = vector.broadcast %8 : vector<10x1xf32> to vector<10x128xf32>
    %10 = arith.mulf %7, %9 : vector<10x128xf32>
    %cst_8 = arith.constant dense<0.000000e+00> : vector<128xf32>
    %11 = vector.multi_reduction <add>, %10, %cst_8 [0] : vector<10x128xf32> to vector<128xf32>
    %12 = vector.shape_cast %11 : vector<128xf32> to vector<1x128xf32>
    %c0_9 = arith.constant 0 : index
    %13 = memref.load %arg5[%c0_9] : memref<1xf32, #tpu.memory_space<smem>>
    %14 = vector.broadcast %13 : f32 to vector<1x128xf32>
    %15 = arith.addf %12, %14 : vector<1x128xf32>
    %16 = arith.negf %15 : vector<1x128xf32>
    %17 = math.exp %16 : vector<1x128xf32>
    %cst_10 = arith.constant 1.000000e+00 : f32
    %18 = vector.broadcast %cst_10 : f32 to vector<1x128xf32>
    %19 = arith.addf %18, %17 : vector<1x128xf32>
    %20 = arith.divf %18, %19 : vector<1x128xf32>
    %c0_11 = arith.constant 0 : index
    %c0_12 = arith.constant 0 : index
    %21 = vector.load %arg6[%c0_11, %c0_12] : memref<1x128xf32, #tpu.memory_space<vmem>>, vector<1x128xf32>
    tpu.vector_store %arg6[%c0_11, %c0_12], %20 {strides = array<i32>} : memref<1x128xf32, #tpu.memory_space<vmem>>, vector<1x128xf32>,
    return
  }
  func.func @transform_0(%arg0: i32) -> (i32, i32) {
    %c0_i32 = arith.constant 0 : i32
    %c0_i32_0 = arith.constant 0 : i32
    return %arg0, %c0_i32 : i32, i32
  }
  func.func @transform_1(%arg0: i32) -> (i32, i32) {
    %c0_i32 = arith.constant 0 : i32
    %c0_i32_0 = arith.constant 0 : i32
    %c0_i32_1 = arith.constant 0 : i32
    return %c0_i32, %c0_i32_0 : i32, i32
  }
  func.func @transform_2(%arg0: i32) -> (i32, i32) {
    %c0_i32 = arith.constant 0 : i32
    %c0_i32_0 = arith.constant 0 : i32
    %c0_i32_1 = arith.constant 0 : i32
    return %c0_i32, %c0_i32_0 : i32, i32
  }
  func.func @transform_3(%arg0: i32) -> (i32, i32) {
    %c0_i32 = arith.constant 0 : i32
    %c0_i32_0 = arith.constant 0 : i32
    %c0_i32_1 = arith.constant 0 : i32
    return %c0_i32, %c0_i32_0 : i32, i32
  }
  func.func @transform_4(%arg0: i32) -> i32 {
    %c0_i32 = arith.constant 0 : i32
    %c0_i32_0 = arith.constant 0 : i32
    return %c0_i32 : i32
  }
  func.func @transform_5(%arg0: i32) -> (i32, i32) {
    %c0_i32 = arith.constant 0 : i32
    %c0_i32_0 = arith.constant 0 : i32
    return %c0_i32, %arg0 : i32, i32
  }
}

</mosaic_0001>

<llo_original>
// kernel: tpu_custom_call.1
$region0: #{tpu_custom_call.1}
  #allocation0 [shape = 'u32[]', space=smem, size = 0x4, offset = 0x4, fixed_abs, tag = 'smem constant byte address 0x4 - core index']
  #allocation1 [shape = 'u32[144,128]{1,0:T(1,128)}', space=vmem, size = 0x12000, scoped, tag = 'internal scratch']
  #allocation2 [shape = 'f32[1]{0:T(128)S(6)}', space=smem, size = 0x200, scoped, tag = 'scoped memory for tpu_custom_call.1']
  %s0 = inlined_call_operand.vmem [shape: f32[8,20], index: 0, kind: input, shape index: {}]
  %s1 = inlined_call_operand.vmem [shape: f32[10,20], index: 1, kind: input, shape index: {}]
  %s2 = inlined_call_operand.vmem [shape: f32[10,1], index: 2, kind: input, shape index: {}]
  %s3 = inlined_call_operand.vmem [shape: f32[10,1], index: 3, kind: input, shape index: {}]
  %s4 = inlined_call_operand.<no memory space> [shape: f32[1], index: 4, kind: input, shape index: {}]
  %s5 = inlined_call_operand.hbm [shape: f32[1,8], index: 5, kind: output, shape index: {}]
  %s6 = sld [smem:[#allocation0]]
  $region30: #{tpu_custom_call.1} parent=0
    _
  %s8 = ssub.s32 1, %s6
  %s9 = scalar_select 0, %s8, %s6
  %10 = sst [smem:[#allocation2]] %s4
  $region1: #{tpu_custom_call.1} parent=0
    #allocation3 [shape = 'u8[512]{0}', space=vmem, size = 0x400, scoped, tag = 'output window, operand 0, single buffered']
    #allocation4 [shape = 's32[1]{0}', space=sflag, size = 0x4, scoped, tag = 'scoped memory for tpu_custom_call.1']
    %11 = vsyncpa [#allocation4], 0
    // Predicated region
    $region2: #{tpu_custom_call.1} parent=1 // pred_check
      _
    $region3: #{tpu_custom_call.1} parent=1 // pred_check_branch
      %13 = sbr.rel (0) target = $region5
    $region4: #{tpu_custom_call.1} parent=1 // pred_region
      _
    $region5: #{tpu_custom_call.1} parent=1 // pred_fallthru
      _
    // Predicated region
    $region6: #{tpu_custom_call.1} parent=1 // pred_check
      _
    $region7: #{tpu_custom_call.1} parent=1 // pred_check_branch
      %15 = sbr.rel (0) target = $region9
    $region8: #{tpu_custom_call.1} parent=1 // pred_region
      _
    $region9: #{tpu_custom_call.1} parent=1 // pred_fallthru
      _
    // Predicated region
    $region10: #{tpu_custom_call.1} parent=1 // pred_check
      _
    $region11: #{tpu_custom_call.1} parent=1 // pred_check_branch
      %17 = sbr.rel (0) target = $region13
    $region12: #{tpu_custom_call.1} parent=1 // pred_region
      _
    $region13: #{tpu_custom_call.1} parent=1 // pred_fallthru
      _
    // Predicated region
    $region14: #{tpu_custom_call.1} parent=1 // pred_check
      _
    $region15: #{tpu_custom_call.1} parent=1 // pred_check_branch
      %19 = sbr.rel (0) target = $region17
    $region16: #{tpu_custom_call.1} parent=1 // pred_region
      _
    $region17: #{tpu_custom_call.1} parent=1 // pred_fallthru
      _
    // Predicated region
    $region18: #{tpu_custom_call.1} parent=1 // pred_check
      _
    $region19: #{tpu_custom_call.1} parent=1 // pred_check_branch
      %21 = sbr.rel (0) target = $region21
    $region20: #{tpu_custom_call.1} parent=1 // pred_region
      _
    $region21: #{tpu_custom_call.1} parent=1 // pred_fallthru
      _
    %v22 = vld [vmem:[%s0] sm:$0xff]
    %v23 = vld [vmem:[%s0 + $0x8] sm:$0xff]
    %v24 = vld [vmem:[%s0 + $0x10] sm:$0xff]
    %v25 = vld [vmem:[%s0 + $0x18] sm:$0xff]
    %v26 = vld [vmem:[%s0 + $0x20] sm:$0xff]
    %v27 = vld [vmem:[%s0 + $0x28] sm:$0xff]
    %v28 = vld [vmem:[%s0 + $0x30] sm:$0xff]
    %v29 = vld [vmem:[%s0 + $0x38] sm:$0xff]
    %v30 = vld [vmem:[%s0 + $0x40] sm:$0xff]
    %v31 = vld [vmem:[%s0 + $0x48] sm:$0xff]
    %v32 = vld [vmem:[%s0 + $0x50] sm:$0xff]
    %v33 = vld [vmem:[%s0 + $0x58] sm:$0xff]
    %v34 = vld [vmem:[%s0 + $0x60] sm:$0xff]
    %v35 = vld [vmem:[%s0 + $0x68] sm:$0xff]
    %v36 = vld [vmem:[%s0 + $0x70] sm:$0xff]
    %v37 = vld [vmem:[%s0 + $0x78] sm:$0xff]
    %v38 = vld [vmem:[%s1] sm:$0xff]
    %v39 = vld [vmem:[%s1 + $0x8] sm:$0x3]
    %v40 = vld [vmem:[%s2] sm:$0xff]
    %v41 = vld [vmem:[%s2 + $0x8] sm:$0x3]
    %43 = vset.pattern.permute.xlu0 0
    %44 = vperm.xlu0 %43, %v40
    %v45 = vpop.permute.xlu0 %44
    %48 = vset.pattern.permute.xlu0 0
    %49 = vperm.xlu0 %48, %v41
    %v50 = vpop.permute.xlu0 %49
    %vm52 = vcmask 162816
    %v54 = vsel %vm52, %v38, 0
    %v57 = vsel %vm52, %v39, 0
    %v60 = vsel %vm52, %v22, 0
    %v63 = vsel %vm52, %v23, 0
    %v66 = vsel %vm52, %v24, 0
    %v69 = vsel %vm52, %v25, 0
    %v72 = vsel %vm52, %v26, 0
    %v75 = vsel %vm52, %v27, 0
    %v78 = vsel %vm52, %v28, 0
    %v81 = vsel %vm52, %v29, 0
    %v84 = vsel %vm52, %v30, 0
    %v87 = vsel %vm52, %v31, 0
    %v90 = vsel %vm52, %v32, 0
    %v93 = vsel %vm52, %v33, 0
    %v96 = vsel %vm52, %v34, 0
    %v99 = vsel %vm52, %v35, 0
    %v102 = vsel %vm52, %v36, 0
    %v105 = vsel %vm52, %v37, 0
    %107 = vmatprep.subr.mxu0 0.0
    %108 = vmatpush1.xpose.msra.mxu0 %v60
    %109 = vmatprep.subr.mxu0 0.0
    %110 = vmatpush1.xpose.msra.mxu0 %v63
    %111 = vmatprep.subr.mxu0 0.0
    %112 = vmatpush1.xpose.msra.mxu0 %v66
    %113 = vmatprep.subr.mxu0 0.0
    %114 = vmatpush1.xpose.msra.mxu0 %v69
    %115 = vmatprep.subr.mxu0 0.0
    %116 = vmatpush1.xpose.msra.mxu0 %v72
    %117 = vmatprep.subr.mxu0 0.0
    %118 = vmatpush1.xpose.msra.mxu0 %v75
    %119 = vmatprep.subr.mxu0 0.0
    %120 = vmatpush1.xpose.msra.mxu0 %v78
    %121 = vmatprep.subr.mxu0 0.0
    %122 = vmatpush1.xpose.msra.mxu0 %v81
    %123 = vmatprep.subr.mxu0 0.0
    %124 = vmatpush1.xpose.msra.mxu0 %v84
    %125 = vmatprep.subr.mxu0 0.0
    %126 = vmatpush1.xpose.msra.mxu0 %v87
    %127 = vmatprep.subr.mxu0 0.0
    %128 = vmatpush1.xpose.msra.mxu0 %v90
    %129 = vmatprep.subr.mxu0 0.0
    %130 = vmatpush1.xpose.msra.mxu0 %v93
    %131 = vmatprep.subr.mxu0 0.0
    %132 = vmatpush1.xpose.msra.mxu0 %v96
    %133 = vmatprep.subr.mxu0 0.0
    %134 = vmatpush1.xpose.msra.mxu0 %v99
    %135 = vmatprep.subr.mxu0 0.0
    %136 = vmatpush1.xpose.msra.mxu0 %v102
    %137 = vmatprep.subr.mxu0 0.0
    %138 = vmatpush1.xpose.msra.mxu0 %v105
    %139 = vmatprep.subr.mxu0 0.0
    %140 = vmatpush1.xpose.msra.mxu0 0.0
    %141 = vmatprep.subr.mxu0 0.0
    %142 = vmatpush1.xpose.msra.mxu0 0.0
    %143 = vmatprep.subr.mxu0 0.0
    %144 = vmatpush1.xpose.msra.mxu0 0.0
    %145 = vmatprep.subr.mxu0 0.0
    %146 = vmatpush1.xpose.msra.mxu0 0.0
    %147 = vmatprep.subr.mxu0 0.0
    %148 = vmatpush1.xpose.msra.mxu0 0.0
    %149 = vmatprep.subr.mxu0 0.0
    %150 = vmatpush1.xpose.msra.mxu0 0.0
    %151 = vmatprep.subr.mxu0 0.0
    %152 = vmatpush1.xpose.msra.mxu0 0.0
    %153 = vmatprep.subr.mxu0 0.0
    %154 = vmatpush1.xpose.msra.mxu0 0.0
    %155 = vmatprep.subr.mxu0 0.0
    %156 = vmatpush1.xpose.msra.mxu0 0.0
    %157 = vmatprep.subr.mxu0 0.0
    %158 = vmatpush1.xpose.msra.mxu0 0.0
    %159 = vmatprep.subr.mxu0 0.0
    %160 = vmatpush1.xpose.msra.mxu0 0.0
    %161 = vmatprep.subr.mxu0 0.0
    %162 = vmatpush1.xpose.msra.mxu0 0.0
    %163 = vmatprep.subr.mxu0 0.0
    %164 = vmatpush1.xpose.msra.mxu0 0.0
    %165 = vmatprep.subr.mxu0 0.0
    %166 = vmatpush1.xpose.msra.mxu0 0.0
    %167 = vmatprep.subr.mxu0 0.0
    %168 = vmatpush1.xpose.msra.mxu0 0.0
    %169 = vmatprep.subr.mxu0 0.0
    %170 = vmatpush1.xpose.msra.mxu0 0.0
    %171 = vmatprep.mubr.f32.mxu0 0.0
    %172 = vmatmul.mubr.f32.gmra.mrb[0].mxu0 %v54
    %v173 = vpop.f32.mrb[0].mxu0
    %v174 = vadd.f32 %v45, %v173
    %v175 = vpop.f32.mrb[0].mxu0
    %176 = vmatprep.mubr.f32.mxu0 0.0
    %177 = vmatmul.mubr.f32.gmra.mrb[0].mxu0 %v57
    %v178 = vpop.f32.mrb[0].mxu0
    %v179 = vadd.f32 %v50, %v178
    %v180 = vpop.f32.mrb[0].mxu0
    %181 = vdwg.mxu0
    %v182 = vmax.f32 %v174, 0.0
    %v183 = vmax.f32 %v179, 0.0
    %v184 = vld [vmem:[%s3] sm:$0xff]
    %v185 = vld [vmem:[%s3 + $0x8] sm:$0x3]
    %187 = vset.pattern.permute.xlu0 0
    %188 = vperm.xlu0 %187, %v184
    %v189 = vpop.permute.xlu0 %188
    %192 = vset.pattern.permute.xlu0 0
    %193 = vperm.xlu0 %192, %v185
    %v194 = vpop.permute.xlu0 %193
    %v196 = vmul.f32 %v182, %v189
    %v197 = vmul.f32 %v183, %v194
    %vm198 = vcmask 1041408
    %v199 = vsel %vm198, %v197, 0.0
    %v200 = vadd.f32 %v196, %v199
    %v201 = vrot.slane %v200, 4
    %v202 = vadd.f32 %v200, %v201
    %v203 = vrot.slane %v202, 2
    %v204 = vadd.f32 %v202, %v203
    %v205 = vrot.slane %v204, 1
    %v206 = vadd.f32 %v204, %v205
    %s207 = sld [smem:[#allocation2]]
    %v208 = vstv %s207
    %v209 = vadd.f32 %v206, %v208
    %v210 = vxor.u32 %v209, 2147483648
    %v211 = vmul.f32 %v210, 1.442695
    %v212 = vpow.pop %v211
    %v213 = vadd.f32 %v212, 1.0
    %v214 = vrcp.pop %v213
    %v215 = vmul.f32 1.0, %v214
    %216 = vst [vmem:[#allocation3] sm:$0x1] %v215
    // Predicated region
    $region22: #{tpu_custom_call.1} parent=1 // pred_check
      _
    $region23: #{tpu_custom_call.1} parent=1 // pred_check_branch
      %218 = sbr.rel (0) target = $region25
    $region24: #{tpu_custom_call.1} parent=1 // pred_region
      %s220 = ssub.s32 16, 16
      %221 = vsyncadd [#allocation4], %s220
      %s223 = sshll.u32 [#allocation3], 4
      %s224 = int_to_ptr.vmem [resolvable:$true] %s223
      %226 = dma.vmem_to_hbm [thread:$0]  %s224, 16, %s5, [#allocation4]
    $region25: #{tpu_custom_call.1} parent=1 // pred_fallthru
      _
    // Predicated region
    $region26: #{tpu_custom_call.1} parent=1 // pred_check
      _
    $region27: #{tpu_custom_call.1} parent=1 // pred_check_branch
      %228 = sbr.rel (0) target = $region29
    $region28: #{tpu_custom_call.1} parent=1 // pred_region
      %229 = dma.done [#allocation4], 16
    $region29: #{tpu_custom_call.1} parent=1 // pred_fallthru
      _
    %230 = vsyncpa [#allocation4], 1

</llo_original>
